<compile_context>
chip_gen: v7x
topology: tpu7x:2x2x1
jax: 0.10.0
libtpu: 0.0.40
codegen_flags: <defaults>
</compile_context>

<pallas_src>
import functools

import jax
import jax.numpy as jnp
from jax.experimental import pallas as pl
from jax.experimental.pallas import tpu as pltpu


def _round_up(x: int, m: int) -> int:
    return ((x + m - 1) // m) * m


def _choose_b_tile(B: int, requested: int) -> int:
    """Batch tile: multiple of 8, >=2 grid steps for larger batches (v7x megacore),
    and < ~12.5% batch-padding waste."""
    b8 = _round_up(B, 8)
    req = max(16, (requested // 16) * 16)       # multiple of 16 (bf16 sublane pack), >= 16
    tile = min(req, b8)
    if B >= 64:
        # Keep at least 2 grid steps so the batch axis can shard across the 2 TCs on v7x.
        tile = min(tile, _round_up(pl.cdiv(B, 2), 8))
    # Shrink tile while padding waste exceeds ~12.5% of B (avoid near-2x padded work).
    while tile > 16 and (_round_up(B, tile) - B) * 8 > B:
        tile = max(16, _round_up(tile // 2, 8))
    return min(tile, b8)


def mlp_actor_kernel(x_ref, w1_ref, b1_ref, w2_ref, b2_ref, w3_ref, b3_ref, out_ref):
    # Fused forward for one batch tile: two tanh-MLP layers (the "base") + linear policy head.
    # Weights arrive as bf16; all accumulation, bias-add and tanh are in f32.
    x = x_ref[...].astype(jnp.bfloat16)
    h = jnp.tanh(
        jnp.dot(x, w1_ref[...], preferred_element_type=jnp.float32) + b1_ref[...]
    )
    z = jnp.tanh(
        jnp.dot(h.astype(jnp.bfloat16), w2_ref[...], preferred_element_type=jnp.float32)
        + b2_ref[...]
    )
    logits = (
        jnp.dot(z.astype(jnp.bfloat16), w3_ref[...], preferred_element_type=jnp.float32)
        + b3_ref[...]
    )
    out_ref[...] = logits.astype(out_ref.dtype)


@functools.partial(jax.jit, static_argnames=("b_tile",))
def mlp_actor_forward(obs, params, *, b_tile: int = 2048):
    """obs: (B, obs_dim) f32. Returns policy logits (B, n_actions) f32."""
    w1, b1, w2, b2, w3, b3 = params
    B, obs_dim = obs.shape
    hidden_size = w1.shape[1]
    latent_size = w2.shape[1]
    n_actions = w3.shape[1]

    # --- bf16 weights (MXU-native); biases stay f32 for the f32 bias-add/tanh path ---
    w1b = w1.astype(jnp.bfloat16)
    w2b = w2.astype(jnp.bfloat16)
    w3b = w3.astype(jnp.bfloat16)

    # --- batch tiling ---
    b_tile_eff = _choose_b_tile(B, b_tile)
    b_padded = _round_up(B, b_tile_eff)
    if b_padded != B:
        obs_in = jnp.zeros((b_padded, obs_dim), obs.dtype).at[:B].set(obs)
    else:
        obs_in = obs
    grid = (b_padded // b_tile_eff,)

    # Weights/biases stay VMEM-resident across grid steps (constant index_map);
    # single-buffered since their block never changes.
    resident = lambda shape: pl.BlockSpec(
        shape, lambda i: (0, 0), pipeline_mode=pl.Buffered(1)
    )

    cost = pl.CostEstimate(
        flops=2 * b_padded * (obs_dim * hidden_size
                              + hidden_size * latent_size
                              + latent_size * n_actions),
        transcendentals=b_padded * (hidden_size + latent_size),
        bytes_accessed=(obs_in.size * 4 + b_padded * n_actions * 4
                        + w1b.size * 2 + w2b.size * 2 + w3b.size * 2
                        + b1.size * 4 + b2.size * 4 + b3.size * 4),
    )

    out = pl.pallas_call(
        mlp_actor_kernel,
        out_shape=jax.ShapeDtypeStruct((b_padded, n_actions), jnp.float32),
        grid=grid,
        in_specs=[
            pl.BlockSpec((b_tile_eff, obs_dim), lambda i: (i, 0)),
            resident((obs_dim, hidden_size)),
            resident((1, hidden_size)),
            resident((hidden_size, latent_size)),
            resident((1, latent_size)),
            resident((latent_size, n_actions)),
            resident((1, n_actions)),
        ],
        out_specs=pl.BlockSpec((b_tile_eff, n_actions), lambda i: (i, 0)),
        compiler_params=pltpu.CompilerParams(dimension_semantics=("parallel",)),
        cost_estimate=cost,
    )(obs_in, w1b, b1, w2b, b2, w3b, b3)

    # Drop batch padding (output columns are exactly n_actions, nothing to slice there).
    return out[:B]


def init_params(key, obs_dim, hidden_size, latent_size, n_actions):
    """Deterministic synthetic init (small uniform, PyTorch-Linear-style bounds)."""
    ks = jax.random.split(key, 6)

    def lin(kw, kb, fan_in, fan_out):
        bound = 1.0 / jnp.sqrt(fan_in)
        w = jax.random.uniform(kw, (fan_in, fan_out), jnp.float32, -bound, bound)
        b = jax.random.uniform(kb, (1, fan_out), jnp.float32, -bound, bound)
        return w, b

    w1, b1 = lin(ks[0], ks[1], obs_dim, hidden_size)
    w2, b2 = lin(ks[2], ks[3], hidden_size, latent_size)
    w3, b3 = lin(ks[4], ks[5], latent_size, n_actions)
    return (w1, b1, w2, b2, w3, b3)


def reference_forward(obs, params):
    """Pure-JAX reference mirroring the kernel's bf16-matmul / f32-accumulate numerics."""
    w1, b1, w2, b2, w3, b3 = params
    bf = jnp.bfloat16
    h = jnp.tanh(jnp.dot(obs.astype(bf), w1.astype(bf),
                         preferred_element_type=jnp.float32) + b1)
    z = jnp.tanh(jnp.dot(h.astype(bf), w2.astype(bf),
                         preferred_element_type=jnp.float32) + b2)
    return jnp.dot(z.astype(bf), w3.astype(bf),
                   preferred_element_type=jnp.float32) + b3


if __name__ == "__main__":
    # Small shapes consistent with an MLP actor over a flat observation vector.
    B, obs_dim, hidden_size, latent_size, n_actions = 8, 16, 32, 32, 6

    key = jax.random.PRNGKey(0)
    k_obs, k_params = jax.random.split(key)
    obs = jax.random.normal(k_obs, (B, obs_dim), dtype=jnp.float32)
    params = init_params(k_params, obs_dim, hidden_size, latent_size, n_actions)

    logits = mlp_actor_forward(obs, params)
    jax.block_until_ready(logits)

    ref = reference_forward(obs, params)
    assert logits.shape == (B, n_actions)
    assert jnp.allclose(logits, ref, atol=1e-4, rtol=1e-4), "mismatch vs JAX reference"

    print("KERNEL_OK")
</pallas_src>

<mosaic_0001>
module attributes {stable_mosaic.version = 11 : i64} {
  func.func @mlp_actor_kernel(%arg0: i32, %arg1: memref<8x16xf32, #tpu.memory_space<vmem>>, %arg2: memref<16x32xbf16, #tpu.memory_space<vmem>>, %arg3: memref<1x32xf32, #tpu.memory_space<vmem>>, %arg4: memref<32x32xbf16, #tpu.memory_space<vmem>>, %arg5: memref<1x32xf32, #tpu.memory_space<vmem>>, %arg6: memref<32x6xbf16, #tpu.memory_space<vmem>>, %arg7: memref<1x6xf32, #tpu.memory_space<vmem>>, %arg8: memref<8x6xf32, #tpu.memory_space<vmem>>) attributes {dimension_semantics = [#tpu.dimension_semantics<parallel>], iteration_bounds = array<i64: 1>, scalar_prefetch = 0 : i64, scratch_operands = 0 : i64, tpu.core_type = #tpu.core_type<tc>, window_params = [{transform_indices = @transform_0, window_bounds = array<i64: 8, 16>}, {pipeline_mode = #tpu.pipeline_mode<synchronous>, transform_indices = @transform_1, window_bounds = array<i64: 16, 32>}, {pipeline_mode = #tpu.pipeline_mode<synchronous>, transform_indices = @transform_2, window_bounds = array<i64: 1, 32>}, {pipeline_mode = #tpu.pipeline_mode<synchronous>, transform_indices = @transform_3, window_bounds = array<i64: 32, 32>}, {pipeline_mode = #tpu.pipeline_mode<synchronous>, transform_indices = @transform_4, window_bounds = array<i64: 1, 32>}, {pipeline_mode = #tpu.pipeline_mode<synchronous>, transform_indices = @transform_5, window_bounds = array<i64: 32, 6>}, {pipeline_mode = #tpu.pipeline_mode<synchronous>, transform_indices = @transform_6, window_bounds = array<i64: 1, 6>}, {transform_indices = @transform_7, window_bounds = array<i64: 8, 6>}]} {
    %c0 = arith.constant 0 : index
    %c0_0 = arith.constant 0 : index
    %0 = vector.load %arg1[%c0, %c0_0] : memref<8x16xf32, #tpu.memory_space<vmem>>, vector<8x16xf32>
    %1 = arith.truncf %0 : vector<8x16xf32> to vector<8x16xbf16>
    %c0_1 = arith.constant 0 : index
    %c0_2 = arith.constant 0 : index
    %2 = vector.load %arg2[%c0_1, %c0_2] : memref<16x32xbf16, #tpu.memory_space<vmem>>, vector<16x32xbf16>
    %cst = arith.constant dense<0.000000e+00> : vector<8x32xf32>
    %3 = tpu.matmul %1, %2, %cst {dimension_numbers = #tpu.dot_dimension_numbers<[1], [0], [0], [1], [0, 0, 1, 1], [], []>} : vector<8x16xbf16>, vector<16x32xbf16>, vector<8x32xf32> -> vector<8x32xf32>
    %c0_3 = arith.constant 0 : index
    %c0_4 = arith.constant 0 : index
    %4 = vector.load %arg3[%c0_3, %c0_4] : memref<1x32xf32, #tpu.memory_space<vmem>>, vector<1x32xf32>
    %5 = vector.broadcast %4 : vector<1x32xf32> to vector<8x32xf32>
    %6 = arith.addf %3, %5 : vector<8x32xf32>
    %7 = math.tanh %6 : vector<8x32xf32>
    %8 = arith.truncf %7 : vector<8x32xf32> to vector<8x32xbf16>
    %c0_5 = arith.constant 0 : index
    %c0_6 = arith.constant 0 : index
    %9 = vector.load %arg4[%c0_5, %c0_6] : memref<32x32xbf16, #tpu.memory_space<vmem>>, vector<32x32xbf16>
    %cst_7 = arith.constant dense<0.000000e+00> : vector<8x32xf32>
    %10 = tpu.matmul %8, %9, %cst_7 {dimension_numbers = #tpu.dot_dimension_numbers<[1], [0], [0], [1], [0, 0, 1, 1], [], []>} : vector<8x32xbf16>, vector<32x32xbf16>, vector<8x32xf32> -> vector<8x32xf32>
    %c0_8 = arith.constant 0 : index
    %c0_9 = arith.constant 0 : index
    %11 = vector.load %arg5[%c0_8, %c0_9] : memref<1x32xf32, #tpu.memory_space<vmem>>, vector<1x32xf32>
    %12 = vector.broadcast %11 : vector<1x32xf32> to vector<8x32xf32>
    %13 = arith.addf %10, %12 : vector<8x32xf32>
    %14 = math.tanh %13 : vector<8x32xf32>
    %15 = arith.truncf %14 : vector<8x32xf32> to vector<8x32xbf16>
    %c0_10 = arith.constant 0 : index
    %c0_11 = arith.constant 0 : index
    %16 = vector.load %arg6[%c0_10, %c0_11] : memref<32x6xbf16, #tpu.memory_space<vmem>>, vector<32x6xbf16>
    %cst_12 = arith.constant dense<0.000000e+00> : vector<8x6xf32>
    %17 = tpu.matmul %15, %16, %cst_12 {dimension_numbers = #tpu.dot_dimension_numbers<[1], [0], [0], [1], [0, 0, 1, 1], [], []>} : vector<8x32xbf16>, vector<32x6xbf16>, vector<8x6xf32> -> vector<8x6xf32>
    %c0_13 = arith.constant 0 : index
    %c0_14 = arith.constant 0 : index
    %18 = vector.load %arg7[%c0_13, %c0_14] : memref<1x6xf32, #tpu.memory_space<vmem>>, vector<1x6xf32>
    %19 = vector.broadcast %18 : vector<1x6xf32> to vector<8x6xf32>
    %20 = arith.addf %17, %19 : vector<8x6xf32>
    %c0_15 = arith.constant 0 : index
    %c0_16 = arith.constant 0 : index
    %21 = vector.load %arg8[%c0_15, %c0_16] : memref<8x6xf32, #tpu.memory_space<vmem>>, vector<8x6xf32>
    tpu.vector_store %arg8[%c0_15, %c0_16], %20 {strides = array<i32>} : memref<8x6xf32, #tpu.memory_space<vmem>>, vector<8x6xf32>,
    return
  }
  func.func @transform_0(%arg0: i32) -> (i32, i32) {
    %c0_i32 = arith.constant 0 : i32
    %c0_i32_0 = arith.constant 0 : i32
    return %arg0, %c0_i32 : i32, i32
  }
  func.func @transform_1(%arg0: i32) -> (i32, i32) {
    %c0_i32 = arith.constant 0 : i32
    %c0_i32_0 = arith.constant 0 : i32
    %c0_i32_1 = arith.constant 0 : i32
    return %c0_i32, %c0_i32_0 : i32, i32
  }
  func.func @transform_2(%arg0: i32) -> (i32, i32) {
    %c0_i32 = arith.constant 0 : i32
    %c0_i32_0 = arith.constant 0 : i32
    %c0_i32_1 = arith.constant 0 : i32
    return %c0_i32, %c0_i32_0 : i32, i32
  }
  func.func @transform_3(%arg0: i32) -> (i32, i32) {
    %c0_i32 = arith.constant 0 : i32
    %c0_i32_0 = arith.constant 0 : i32
    %c0_i32_1 = arith.constant 0 : i32
    return %c0_i32, %c0_i32_0 : i32, i32
  }
  func.func @transform_4(%arg0: i32) -> (i32, i32) {
    %c0_i32 = arith.constant 0 : i32
    %c0_i32_0 = arith.constant 0 : i32
    %c0_i32_1 = arith.constant 0 : i32
    return %c0_i32, %c0_i32_0 : i32, i32
  }
  func.func @transform_5(%arg0: i32) -> (i32, i32) {
    %c0_i32 = arith.constant 0 : i32
    %c0_i32_0 = arith.constant 0 : i32
    %c0_i32_1 = arith.constant 0 : i32
    return %c0_i32, %c0_i32_0 : i32, i32
  }
  func.func @transform_6(%arg0: i32) -> (i32, i32) {
    %c0_i32 = arith.constant 0 : i32
    %c0_i32_0 = arith.constant 0 : i32
    %c0_i32_1 = arith.constant 0 : i32
    return %c0_i32, %c0_i32_0 : i32, i32
  }
  func.func @transform_7(%arg0: i32) -> (i32, i32) {
    %c0_i32 = arith.constant 0 : i32
    %c0_i32_0 = arith.constant 0 : i32
    return %arg0, %c0_i32 : i32, i32
  }
}

</mosaic_0001>

<llo_original>
// kernel: mlp_actor_forward.1
$region0: #{mlp_actor_forward.1}
  #allocation0 [shape = 'u32[]', space=smem, size = 0x4, offset = 0x4, fixed_abs, tag = 'smem constant byte address 0x4 - core index']
  #allocation1 [shape = 'u32[144,128]{1,0:T(1,128)}', space=vmem, size = 0x12000, scoped, tag = 'internal scratch']
  %s0 = inlined_call_operand.vmem [shape: f32[8,16], index: 0, kind: input, shape index: {}]
  %s1 = inlined_call_operand.vmem [shape: bf16[16,32], index: 1, kind: input, shape index: {}]
  %s2 = inlined_call_operand.vmem [shape: f32[1,32], index: 2, kind: input, shape index: {}]
  %s3 = inlined_call_operand.vmem [shape: bf16[32,32], index: 3, kind: input, shape index: {}]
  %s4 = inlined_call_operand.vmem [shape: f32[1,32], index: 4, kind: input, shape index: {}]
  %s5 = inlined_call_operand.vmem [shape: bf16[32,6], index: 5, kind: input, shape index: {}]
  %s6 = inlined_call_operand.vmem [shape: f32[1,6], index: 6, kind: input, shape index: {}]
  %s7 = inlined_call_operand.hbm [shape: f32[8,6], index: 7, kind: output, shape index: {}]
  %s8 = sld [smem:[#allocation0]]
  $region38: #{mlp_actor_forward.1} parent=0
    _
  %s10 = ssub.s32 1, %s8
  %s11 = scalar_select 0, %s10, %s8
  $region1: #{mlp_actor_forward.1} parent=0
    #allocation2 [shape = 'u8[4096]{0}', space=vmem, size = 0x1000, scoped, tag = 'output window, operand 0, single buffered']
    #allocation3 [shape = 's32[1]{0}', space=sflag, size = 0x4, scoped, tag = 'scoped memory for mlp_actor_forward.1']
    %12 = vsyncpa [#allocation3], 0
    // Predicated region
    $region2: #{mlp_actor_forward.1} parent=1 // pred_check
      _
    $region3: #{mlp_actor_forward.1} parent=1 // pred_check_branch
      %14 = sbr.rel (0) target = $region5
    $region4: #{mlp_actor_forward.1} parent=1 // pred_region
      _
    $region5: #{mlp_actor_forward.1} parent=1 // pred_fallthru
      _
    // Predicated region
    $region6: #{mlp_actor_forward.1} parent=1 // pred_check
      _
    $region7: #{mlp_actor_forward.1} parent=1 // pred_check_branch
      %16 = sbr.rel (0) target = $region9
    $region8: #{mlp_actor_forward.1} parent=1 // pred_region
      _
    $region9: #{mlp_actor_forward.1} parent=1 // pred_fallthru
      _
    // Predicated region
    $region10: #{mlp_actor_forward.1} parent=1 // pred_check
      _
    $region11: #{mlp_actor_forward.1} parent=1 // pred_check_branch
      %18 = sbr.rel (0) target = $region13
    $region12: #{mlp_actor_forward.1} parent=1 // pred_region
      _
    $region13: #{mlp_actor_forward.1} parent=1 // pred_fallthru
      _
    // Predicated region
    $region14: #{mlp_actor_forward.1} parent=1 // pred_check
      _
    $region15: #{mlp_actor_forward.1} parent=1 // pred_check_branch
      %20 = sbr.rel (0) target = $region17
    $region16: #{mlp_actor_forward.1} parent=1 // pred_region
      _
    $region17: #{mlp_actor_forward.1} parent=1 // pred_fallthru
      _
    // Predicated region
    $region18: #{mlp_actor_forward.1} parent=1 // pred_check
      _
    $region19: #{mlp_actor_forward.1} parent=1 // pred_check_branch
      %22 = sbr.rel (0) target = $region21
    $region20: #{mlp_actor_forward.1} parent=1 // pred_region
      _
    $region21: #{mlp_actor_forward.1} parent=1 // pred_fallthru
      _
    // Predicated region
    $region22: #{mlp_actor_forward.1} parent=1 // pred_check
      _
    $region23: #{mlp_actor_forward.1} parent=1 // pred_check_branch
      %24 = sbr.rel (0) target = $region25
    $region24: #{mlp_actor_forward.1} parent=1 // pred_region
      _
    $region25: #{mlp_actor_forward.1} parent=1 // pred_fallthru
      _
    // Predicated region
    $region26: #{mlp_actor_forward.1} parent=1 // pred_check
      _
    $region27: #{mlp_actor_forward.1} parent=1 // pred_check_branch
      %26 = sbr.rel (0) target = $region29
    $region28: #{mlp_actor_forward.1} parent=1 // pred_region
      _
    $region29: #{mlp_actor_forward.1} parent=1 // pred_fallthru
      _
    %v28 = vld [vmem:[%s0] sm:$0xff]
    %v29 = vpack.c.bf16 %v28, %v28
    %v30 = vld [vmem:[%s1] sm:$0xf]
    %v31 = vld [vmem:[%s1 + $0x4] sm:$0xf]
    %v32 = vld [vmem:[%s2] sm:$0x1]
    %v34 = vlaneseq
    %v35 = vshrl.u32 %v34, 7
    %v36 = vsub.s32 0, %v35
    %v37 = vrot.slane %v32, %v36
    %v41 = vunpack.c.l.b16 %v30
    %v42 = vunpack.c.l.b16 %v31
    %v43 = vpack.c.b16 %v42, %v41
    %vm45 = vcmask 130048
    %v47 = vsel %vm45, %v29, 0
    %49 = vmatprep.subr.bf16.mxu0 0
    %50 = vmatpush1.bf16.msra.mxu0 %v43
    %51 = vmatprep.subr.bf16.mxu0 0
    %52 = vmatpush1.bf16.msra.mxu0 0
    %53 = vmatprep.subr.bf16.mxu0 0
    %54 = vmatpush1.bf16.msra.mxu0 0
    %55 = vmatprep.subr.bf16.mxu0 0
    %56 = vmatpush1.bf16.msra.mxu0 0
    %57 = vmatprep.subr.bf16.mxu0 0
    %58 = vmatpush1.bf16.msra.mxu0 0
    %59 = vmatprep.subr.bf16.mxu0 0
    %60 = vmatpush1.bf16.msra.mxu0 0
    %61 = vmatprep.subr.bf16.mxu0 0
    %62 = vmatpush1.bf16.msra.mxu0 0
    %63 = vmatprep.subr.bf16.mxu0 0
    %64 = vmatpush1.bf16.msra.mxu0 0
    %65 = vmatprep.subr.bf16.mxu0 0
    %66 = vmatpush1.bf16.msra.mxu0 0
    %67 = vmatprep.subr.bf16.mxu0 0
    %68 = vmatpush1.bf16.msra.mxu0 0
    %69 = vmatprep.subr.bf16.mxu0 0
    %70 = vmatpush1.bf16.msra.mxu0 0
    %71 = vmatprep.subr.bf16.mxu0 0
    %72 = vmatpush1.bf16.msra.mxu0 0
    %73 = vmatprep.subr.bf16.mxu0 0
    %74 = vmatpush1.bf16.msra.mxu0 0
    %75 = vmatprep.subr.bf16.mxu0 0
    %76 = vmatpush1.bf16.msra.mxu0 0
    %77 = vmatprep.subr.bf16.mxu0 0
    %78 = vmatpush1.bf16.msra.mxu0 0
    %79 = vmatprep.subr.bf16.mxu0 0
    %80 = vmatpush1.bf16.msra.mxu0 0
    %81 = vmatprep.mubr.bf16.mxu0 0
    %82 = vmatmul.mubr.bf16.gmra.mrb[0].mxu0 %v47
    %v83 = vpop.f32.mrb[0].mxu0
    %v84 = vadd.f32 %v37, %v83
    %v85 = vpop.f32.mrb[0].mxu0
    %v86 = vpop.f32.mrb[0].mxu0
    %v87 = vpop.f32.mrb[0].mxu0
    %88 = vdwg.mxu0
    %v89 = vtanh.pop %v84
    %v90 = vpack.c.bf16 %v89, %v89
    %v91 = vld [vmem:[%s3] sm:$0xf]
    %v92 = vld [vmem:[%s3 + $0x4] sm:$0xf]
    %v93 = vld [vmem:[%s3 + $0x8] sm:$0xf]
    %v94 = vld [vmem:[%s3 + $0xc] sm:$0xf]
    %v95 = vld [vmem:[%s4] sm:$0x1]
    %v97 = vlaneseq
    %v98 = vshrl.u32 %v97, 7
    %v99 = vsub.s32 0, %v98
    %v100 = vrot.slane %v95, %v99
    %v106 = vunpack.c.l.b16 %v91
    %v107 = vunpack.c.l.b16 %v92
    %v108 = vunpack.c.l.b16 %v93
    %v109 = vunpack.c.l.b16 %v94
    %v110 = vpack.c.b16 %v107, %v106
    %v111 = vpack.c.b16 %v109, %v108
    %vm114 = vcmask 261120
    %v116 = vsel %vm114, %v90, 0
    %118 = vmatprep.subr.bf16.mxu0 0
    %119 = vmatpush1.bf16.msra.mxu0 %v110
    %120 = vmatprep.subr.bf16.mxu0 0
    %121 = vmatpush1.bf16.msra.mxu0 %v111
    %122 = vmatprep.subr.bf16.mxu0 0
    %123 = vmatpush1.bf16.msra.mxu0 0
    %124 = vmatprep.subr.bf16.mxu0 0
    %125 = vmatpush1.bf16.msra.mxu0 0
    %126 = vmatprep.subr.bf16.mxu0 0
    %127 = vmatpush1.bf16.msra.mxu0 0
    %128 = vmatprep.subr.bf16.mxu0 0
    %129 = vmatpush1.bf16.msra.mxu0 0
    %130 = vmatprep.subr.bf16.mxu0 0
    %131 = vmatpush1.bf16.msra.mxu0 0
    %132 = vmatprep.subr.bf16.mxu0 0
    %133 = vmatpush1.bf16.msra.mxu0 0
    %134 = vmatprep.subr.bf16.mxu0 0
    %135 = vmatpush1.bf16.msra.mxu0 0
    %136 = vmatprep.subr.bf16.mxu0 0
    %137 = vmatpush1.bf16.msra.mxu0 0
    %138 = vmatprep.subr.bf16.mxu0 0
    %139 = vmatpush1.bf16.msra.mxu0 0
    %140 = vmatprep.subr.bf16.mxu0 0
    %141 = vmatpush1.bf16.msra.mxu0 0
    %142 = vmatprep.subr.bf16.mxu0 0
    %143 = vmatpush1.bf16.msra.mxu0 0
    %144 = vmatprep.subr.bf16.mxu0 0
    %145 = vmatpush1.bf16.msra.mxu0 0
    %146 = vmatprep.subr.bf16.mxu0 0
    %147 = vmatpush1.bf16.msra.mxu0 0
    %148 = vmatprep.subr.bf16.mxu0 0
    %149 = vmatpush1.bf16.msra.mxu0 0
    %150 = vmatprep.mubr.bf16.mxu0 0
    %151 = vmatmul.mubr.bf16.gmra.mrb[0].mxu0 %v116
    %v152 = vpop.f32.mrb[0].mxu0
    %v153 = vadd.f32 %v100, %v152
    %v154 = vpop.f32.mrb[0].mxu0
    %v155 = vpop.f32.mrb[0].mxu0
    %v156 = vpop.f32.mrb[0].mxu0
    %157 = vdwg.mxu0
    %v158 = vtanh.pop %v153
    %v159 = vpack.c.bf16 %v158, %v158
    %v160 = vld [vmem:[%s5] sm:$0xf]
    %v161 = vld [vmem:[%s5 + $0x4] sm:$0xf]
    %v162 = vld [vmem:[%s5 + $0x8] sm:$0xf]
    %v163 = vld [vmem:[%s5 + $0xc] sm:$0xf]
    %v164 = vld [vmem:[%s6] sm:$0x1]
    %v166 = vlaneseq
    %v167 = vshrl.u32 %v166, 7
    %v168 = vsub.s32 0, %v167
    %v169 = vrot.slane %v164, %v168
    %v175 = vunpack.c.l.b16 %v160
    %v176 = vunpack.c.l.b16 %v161
    %v177 = vunpack.c.l.b16 %v162
    %v178 = vunpack.c.l.b16 %v163
    %v179 = vpack.c.b16 %v176, %v175
    %v180 = vpack.c.b16 %v178, %v177
    %v184 = vsel %vm114, %v159, 0
    %186 = vmatprep.subr.bf16.mxu0 0
    %187 = vmatpush1.bf16.msra.mxu0 %v179
    %188 = vmatprep.subr.bf16.mxu0 0
    %189 = vmatpush1.bf16.msra.mxu0 %v180
    %190 = vmatprep.subr.bf16.mxu0 0
    %191 = vmatpush1.bf16.msra.mxu0 0
    %192 = vmatprep.subr.bf16.mxu0 0
    %193 = vmatpush1.bf16.msra.mxu0 0
    %194 = vmatprep.subr.bf16.mxu0 0
    %195 = vmatpush1.bf16.msra.mxu0 0
    %196 = vmatprep.subr.bf16.mxu0 0
    %197 = vmatpush1.bf16.msra.mxu0 0
    %198 = vmatprep.subr.bf16.mxu0 0
    %199 = vmatpush1.bf16.msra.mxu0 0
    %200 = vmatprep.subr.bf16.mxu0 0
    %201 = vmatpush1.bf16.msra.mxu0 0
    %202 = vmatprep.subr.bf16.mxu0 0
    %203 = vmatpush1.bf16.msra.mxu0 0
    %204 = vmatprep.subr.bf16.mxu0 0
    %205 = vmatpush1.bf16.msra.mxu0 0
    %206 = vmatprep.subr.bf16.mxu0 0
    %207 = vmatpush1.bf16.msra.mxu0 0
    %208 = vmatprep.subr.bf16.mxu0 0
    %209 = vmatpush1.bf16.msra.mxu0 0
    %210 = vmatprep.subr.bf16.mxu0 0
    %211 = vmatpush1.bf16.msra.mxu0 0
    %212 = vmatprep.subr.bf16.mxu0 0
    %213 = vmatpush1.bf16.msra.mxu0 0
    %214 = vmatprep.subr.bf16.mxu0 0
    %215 = vmatpush1.bf16.msra.mxu0 0
    %216 = vmatprep.subr.bf16.mxu0 0
    %217 = vmatpush1.bf16.msra.mxu0 0
    %218 = vmatprep.mubr.bf16.mxu0 0
    %219 = vmatmul.mubr.bf16.gmra.mrb[0].mxu0 %v184
    %v220 = vpop.f32.mrb[0].mxu0
    %v221 = vadd.f32 %v169, %v220
    %v222 = vpop.f32.mrb[0].mxu0
    %v223 = vpop.f32.mrb[0].mxu0
    %v224 = vpop.f32.mrb[0].mxu0
    %225 = vdwg.mxu0
    %vm226 = vcmask 48128
    %227 = vst.msk [vmem:[#allocation2] sm:$0xff] %vm226, %v221
    // Predicated region
    $region30: #{mlp_actor_forward.1} parent=1 // pred_check
      _
    $region31: #{mlp_actor_forward.1} parent=1 // pred_check_branch
      %229 = sbr.rel (0) target = $region33
    $region32: #{mlp_actor_forward.1} parent=1 // pred_region
      %s231 = ssub.s32 128, 128
      %232 = vsyncadd [#allocation3], %s231
      %s234 = sshll.u32 [#allocation2], 4
      %s235 = int_to_ptr.vmem [resolvable:$true] %s234
      %237 = dma.vmem_to_hbm [thread:$0]  %s235, 128, %s7, [#allocation3]
    $region33: #{mlp_actor_forward.1} parent=1 // pred_fallthru
      _
    // Predicated region
    $region34: #{mlp_actor_forward.1} parent=1 // pred_check
      _
    $region35: #{mlp_actor_forward.1} parent=1 // pred_check_branch
      %239 = sbr.rel (0) target = $region37
    $region36: #{mlp_actor_forward.1} parent=1 // pred_region
      %240 = dma.done [#allocation3], 128
    $region37: #{mlp_actor_forward.1} parent=1 // pred_fallthru
      _
    %241 = vsyncpa [#allocation3], 1

</llo_original>
